<compile_context>
chip_gen: v7x
topology: tpu7x:2x2x1
jax: 0.10.0
libtpu: 0.0.40
codegen_flags: <defaults>
</compile_context>

<pallas_src>
import functools

import jax
import jax.numpy as jnp
from jax.experimental import pallas as pl
from jax.experimental.pallas import tpu as pltpu

LANE = 128  # pad the action axis to one full lane group for lane-dense stores


def _reinforce_fused_kernel(x_ref, u_ref, w1_ref, b1_ref, w2d_ref, b2d_ref,
                            out_ref, *, a_dim):
    tb = x_ref.shape[0]
    lanes = out_ref.shape[1]

    # ---- fc1 / fc2 on the MXU (idle otherwise). ----
    x = x_ref[...]                                                         # (tb, obs)
    h = jnp.maximum(
        jnp.dot(x, w1_ref[...], preferred_element_type=jnp.float32) + b1_ref[...],
        0.0)                                                               # (tb, hidden)
    # w2d has the action columns duplicated into lane groups [0,a_dim) and
    # [a_dim, 2*a_dim); every other lane (and b2d there) is zero.
    z = jnp.dot(h, w2d_ref[...], preferred_element_type=jnp.float32) + b2d_ref[...]

    lane = jax.lax.broadcasted_iota(jnp.int32, (tb, lanes), 1)
    grp_logits = lane < a_dim
    grp_probs = (lane >= a_dim) & (lane < 2 * a_dim)

    # ---- masked softmax over the duplicated logits in the second lane group ----
    neg = jnp.float32(-1e30)
    zm = jnp.where(grp_probs, z, neg)
    m = jnp.max(zm, axis=-1, keepdims=True)
    e = jnp.where(grp_probs, jnp.exp(zm - m), 0.0)
    denom = jnp.sum(e, axis=-1, keepdims=True)
    probs = e / denom                     # nonzero only on the prob lane group

    # ---- inverse-CDF categorical sample: one uniform per row (host-side RNG) ----
    u = u_ref[...]                        # (tb, 1) in [0, 1)
    cdf = jnp.zeros((tb, 1), jnp.float32)
    act = jnp.zeros((tb, 1), jnp.float32)
    for a in range(a_dim - 1):            # a_dim is tiny -> fully unrolled
        cdf = cdf + jnp.sum(jnp.where(lane == a_dim + a, probs, 0.0),
                            axis=-1, keepdims=True)
        act = act + (u >= cdf).astype(jnp.float32)
    lane_f = lane.astype(jnp.float32)
    aprob = jnp.sum(jnp.where(lane_f == (jnp.float32(a_dim) + act), probs, 0.0),
                    axis=-1, keepdims=True)

    # ---- single lane-dense packed output slab ----
    #   lanes [0, a_dim)        raw logits (module.forward)
    #   lanes [a_dim, 2*a_dim)  softmax probs (sd_sampler softmax)
    #   lane  2*a_dim           sampled action (as f32)
    #   lane  2*a_dim + 1       prob of the sampled action
    out = jnp.where(grp_logits, z, 0.0) + probs
    out = out + jnp.where(lane == 2 * a_dim, act, 0.0)
    out = out + jnp.where(lane == 2 * a_dim + 1, aprob, 0.0)
    out_ref[...] = out


@functools.partial(jax.jit, static_argnames=("block_b",))
def reinforce_forward_sample(x, w1, b1, w2, b2, key, *, block_b=None):
    """Fused policy step.

    Returns (logits, probs, actions, action_probs) where
      logits       == relu(x @ w1 + b1) @ w2 + b2        (module.forward)
      probs        == softmax(logits, axis=-1)           (sd_sampler softmax)
      actions      == categorical sample per row         (sd_sampler sample)
      action_probs == probs[row, actions[row]]
    """
    B, obs_dim = x.shape
    hidden, action_dim = w2.shape
    assert 2 * action_dim + 2 <= LANE, "packed-output layout assumes a small action space"
    if block_b is None:
        block_b = B                      # grid=(1,) by default: overhead-bound otherwise
    assert B % block_b == 0 and (block_b == B or block_b % 8 == 0)

    # One uniform per row for inverse-CDF sampling (host-side jax.random; avoids the
    # in-kernel hardware PRNG, which also has no interpret-mode lowering).
    u = jax.random.uniform(key, (B, 1), jnp.float32)

    b1r = b1.reshape(1, hidden)
    b2r = b2.reshape(1, action_dim)
    w2d = jnp.zeros((hidden, LANE), jnp.float32)
    w2d = w2d.at[:, :action_dim].set(w2).at[:, action_dim:2 * action_dim].set(w2)
    b2d = jnp.zeros((1, LANE), jnp.float32)
    b2d = b2d.at[:, :action_dim].set(b2r).at[:, action_dim:2 * action_dim].set(b2r)

    grid = (B // block_b,)
    flops = 2 * B * (obs_dim * hidden + hidden * 2 * action_dim)
    transcendentals = B * LANE           # one exp pass over the padded lanes
    bytes_accessed = 4 * (x.size + B + w1.size + hidden + hidden * LANE + LANE
                          + B * LANE)

    kernel = functools.partial(_reinforce_fused_kernel, a_dim=action_dim)
    slab = pl.pallas_call(
        kernel,
        out_shape=jax.ShapeDtypeStruct((B, LANE), jnp.float32),
        grid_spec=pltpu.PrefetchScalarGridSpec(
            num_scalar_prefetch=0,
            grid=grid,
            in_specs=[
                pl.BlockSpec((block_b, obs_dim), lambda i: (i, 0)),   # x: per block
                pl.BlockSpec((block_b, 1), lambda i: (i, 0)),         # uniforms: per block
                pl.BlockSpec((obs_dim, hidden), lambda i: (0, 0)),    # w1: resident
                pl.BlockSpec((1, hidden), lambda i: (0, 0)),          # b1: resident
                pl.BlockSpec((hidden, LANE), lambda i: (0, 0)),       # w2 (padded, dup): resident
                pl.BlockSpec((1, LANE), lambda i: (0, 0)),            # b2 (padded, dup): resident
            ],
            out_specs=pl.BlockSpec((block_b, LANE), lambda i: (i, 0)),
        ),
        compiler_params=pltpu.CompilerParams(dimension_semantics=("parallel",)),
        cost_estimate=pl.CostEstimate(flops=flops,
                                      transcendentals=transcendentals,
                                      bytes_accessed=bytes_accessed),
    )(x, u, w1, b1r, w2d, b2d)

    logits = slab[:, :action_dim]
    probs = slab[:, action_dim:2 * action_dim]
    actions = slab[:, 2 * action_dim].astype(jnp.int32)
    action_probs = slab[:, 2 * action_dim + 1]
    return logits, probs, actions, action_probs


def reinforce_forward(x, w1, b1, w2, b2, *, block_b=None):
    """Exact analogue of REINFORCE.forward: returns only the raw logits."""
    logits, _, _, _ = reinforce_forward_sample(
        x, w1, b1, w2, b2, jax.random.PRNGKey(0), block_b=block_b)
    return logits


def init_params(key, observation_dim=4, hidden=256, action_dim=2):
    """Deterministic parameter init (shapes from REINFORCE.__init__)."""
    k1, k2, k3, k4 = jax.random.split(key, 4)
    lim1 = 1.0 / jnp.sqrt(observation_dim)
    lim2 = 1.0 / jnp.sqrt(hidden)
    w1 = jax.random.uniform(k1, (observation_dim, hidden), jnp.float32, -lim1, lim1)
    b1 = jax.random.uniform(k2, (1, hidden), jnp.float32, -lim1, lim1)
    w2 = jax.random.uniform(k3, (hidden, action_dim), jnp.float32, -lim2, lim2)
    b2 = jax.random.uniform(k4, (1, action_dim), jnp.float32, -lim2, lim2)
    return w1, b1, w2, b2


if __name__ == "__main__":
    observation_dim, action_dim, hidden = 4, 2, 256
    batch = 64                       # env steps / vectorized envs; single grid block

    key = jax.random.PRNGKey(0)
    kx, kp, ks = jax.random.split(key, 3)
    x = jax.random.normal(kx, (batch, observation_dim), jnp.float32)
    w1, b1, w2, b2 = init_params(kp, observation_dim, hidden, action_dim)

    logits, probs, actions, action_probs = reinforce_forward_sample(
        x, w1, b1, w2, b2, ks)
    jax.block_until_ready(logits)

    # Pure-JAX reference of the forward / softmax semantics.
    h_ref = jnp.maximum(
        jnp.dot(x, w1, precision=jax.lax.Precision.HIGHEST) + b1, 0.0)
    ref_logits = jnp.dot(h_ref, w2, precision=jax.lax.Precision.HIGHEST) + b2
    ref_probs = jax.nn.softmax(ref_logits, axis=-1)

    assert logits.shape == (batch, action_dim)
    assert probs.shape == (batch, action_dim)
    assert actions.shape == (batch,) and actions.dtype == jnp.int32
    assert jnp.allclose(logits, ref_logits, atol=1e-2, rtol=1e-2)
    assert jnp.allclose(probs, ref_probs, atol=1e-2, rtol=1e-2)
    assert bool(jnp.all((actions >= 0) & (actions < action_dim)))
    gathered = jnp.take_along_axis(probs, actions[:, None], axis=-1)[:, 0]
    assert jnp.allclose(action_probs, gathered, atol=1e-5, rtol=1e-5)

    # TODO(synk): reward_function / train (discounted-return loss, autograd backward,
    # Adam update, host-side episode buffer) are training-time utilities with no
    # forward-pass Pallas analogue.
    print("KERNEL_OK")
</pallas_src>

<mosaic_0001>
module attributes {stable_mosaic.version = 11 : i64} {
  func.func @_reinforce_fused_kernel(%arg0: i32, %arg1: memref<64x4xf32, #tpu.memory_space<vmem>>, %arg2: memref<64x1xf32, #tpu.memory_space<vmem>>, %arg3: memref<4x256xf32, #tpu.memory_space<vmem>>, %arg4: memref<1x256xf32, #tpu.memory_space<vmem>>, %arg5: memref<256x128xf32, #tpu.memory_space<vmem>>, %arg6: memref<1x128xf32, #tpu.memory_space<vmem>>, %arg7: memref<64x128xf32, #tpu.memory_space<vmem>>) attributes {dimension_semantics = [#tpu.dimension_semantics<parallel>], iteration_bounds = array<i64: 1>, scalar_prefetch = 0 : i64, scratch_operands = 0 : i64, tpu.core_type = #tpu.core_type<tc>, window_params = [{transform_indices = @transform_0, window_bounds = array<i64: 64, 4>}, {transform_indices = @transform_1, window_bounds = array<i64: 64, 1>}, {pipeline_mode = #tpu.pipeline_mode<synchronous>, transform_indices = @transform_2, window_bounds = array<i64: 4, 256>}, {pipeline_mode = #tpu.pipeline_mode<synchronous>, transform_indices = @transform_3, window_bounds = array<i64: 1, 256>}, {pipeline_mode = #tpu.pipeline_mode<synchronous>, transform_indices = @transform_4, window_bounds = array<i64: 256, 128>}, {pipeline_mode = #tpu.pipeline_mode<synchronous>, transform_indices = @transform_5, window_bounds = array<i64: 1, 128>}, {transform_indices = @transform_6, window_bounds = array<i64: 64, 128>}]} {
    %c0 = arith.constant 0 : index
    %c0_0 = arith.constant 0 : index
    %0 = vector.load %arg1[%c0, %c0_0] : memref<64x4xf32, #tpu.memory_space<vmem>>, vector<64x4xf32>
    %c0_1 = arith.constant 0 : index
    %c0_2 = arith.constant 0 : index
    %1 = vector.load %arg3[%c0_1, %c0_2] : memref<4x256xf32, #tpu.memory_space<vmem>>, vector<4x256xf32>
    %cst = arith.constant dense<0.000000e+00> : vector<64x256xf32>
    %2 = tpu.matmul %0, %1, %cst {dimension_numbers = #tpu.dot_dimension_numbers<[1], [0], [0], [1], [0, 0, 1, 1], [], []>} : vector<64x4xf32>, vector<4x256xf32>, vector<64x256xf32> -> vector<64x256xf32>
    %c0_3 = arith.constant 0 : index
    %c0_4 = arith.constant 0 : index
    %3 = vector.load %arg4[%c0_3, %c0_4] : memref<1x256xf32, #tpu.memory_space<vmem>>, vector<1x256xf32>
    %4 = vector.broadcast %3 : vector<1x256xf32> to vector<64x256xf32>
    %5 = arith.addf %2, %4 : vector<64x256xf32>
    %cst_5 = arith.constant 0.000000e+00 : f32
    %6 = vector.broadcast %cst_5 : f32 to vector<64x256xf32>
    %7 = arith.maximumf %5, %6 : vector<64x256xf32>
    %c0_6 = arith.constant 0 : index
    %c0_7 = arith.constant 0 : index
    %8 = vector.load %arg5[%c0_6, %c0_7] : memref<256x128xf32, #tpu.memory_space<vmem>>, vector<256x128xf32>
    %cst_8 = arith.constant dense<0.000000e+00> : vector<64x128xf32>
    %9 = tpu.matmul %7, %8, %cst_8 {dimension_numbers = #tpu.dot_dimension_numbers<[1], [0], [0], [1], [0, 0, 1, 1], [], []>} : vector<64x256xf32>, vector<256x128xf32>, vector<64x128xf32> -> vector<64x128xf32>
    %c0_9 = arith.constant 0 : index
    %c0_10 = arith.constant 0 : index
    %10 = vector.load %arg6[%c0_9, %c0_10] : memref<1x128xf32, #tpu.memory_space<vmem>>, vector<1x128xf32>
    %11 = vector.broadcast %10 : vector<1x128xf32> to vector<64x128xf32>
    %12 = arith.addf %9, %11 : vector<64x128xf32>
    %13 = tpu.iota {dimensions = array<i32: 1>} : vector<64x128xi32>
    %c2_i32 = arith.constant 2 : i32
    %14 = vector.broadcast %c2_i32 : i32 to vector<64x128xi32>
    %15 = arith.cmpi slt, %13, %14 : vector<64x128xi32>
    %c2_i32_11 = arith.constant 2 : i32
    %16 = vector.broadcast %c2_i32_11 : i32 to vector<64x128xi32>
    %17 = arith.cmpi sge, %13, %16 : vector<64x128xi32>
    %c4_i32 = arith.constant 4 : i32
    %18 = vector.broadcast %c4_i32 : i32 to vector<64x128xi32>
    %19 = arith.cmpi slt, %13, %18 : vector<64x128xi32>
    %20 = arith.andi %17, %19 : vector<64x128xi1>
    %cst_12 = arith.constant -1.000000e+30 : f32
    %21 = vector.broadcast %cst_12 : f32 to vector<64x128xf32>
    %22 = arith.select %20, %12, %21 : vector<64x128xi1>, vector<64x128xf32>
    %cst_13 = arith.constant dense<0xFF800000> : vector<64xf32>
    %23 = vector.multi_reduction <maximumf>, %22, %cst_13 [1] : vector<64x128xf32> to vector<64xf32>
    %24 = vector.shape_cast %23 : vector<64xf32> to vector<64x1xf32>
    %25 = vector.broadcast %24 : vector<64x1xf32> to vector<64x128xf32>
    %26 = arith.subf %22, %25 : vector<64x128xf32>
    %27 = math.exp %26 : vector<64x128xf32>
    %cst_14 = arith.constant 0.000000e+00 : f32
    %28 = vector.broadcast %cst_14 : f32 to vector<64x128xf32>
    %29 = arith.select %20, %27, %28 : vector<64x128xi1>, vector<64x128xf32>
    %cst_15 = arith.constant dense<0.000000e+00> : vector<64xf32>
    %30 = vector.multi_reduction <add>, %29, %cst_15 [1] : vector<64x128xf32> to vector<64xf32>
    %31 = vector.shape_cast %30 : vector<64xf32> to vector<64x1xf32>
    %32 = vector.broadcast %31 : vector<64x1xf32> to vector<64x128xf32>
    %33 = arith.divf %29, %32 : vector<64x128xf32>
    %c0_16 = arith.constant 0 : index
    %c0_17 = arith.constant 0 : index
    %34 = vector.load %arg2[%c0_16, %c0_17] : memref<64x1xf32, #tpu.memory_space<vmem>>, vector<64x1xf32>
    %cst_18 = arith.constant 0.000000e+00 : f32
    %35 = vector.broadcast %cst_18 : f32 to vector<64x1xf32>
    %cst_19 = arith.constant 0.000000e+00 : f32
    %36 = vector.broadcast %cst_19 : f32 to vector<64x1xf32>
    %c2_i32_20 = arith.constant 2 : i32
    %37 = vector.broadcast %c2_i32_20 : i32 to vector<64x128xi32>
    %38 = arith.cmpi eq, %13, %37 : vector<64x128xi32>
    %cst_21 = arith.constant 0.000000e+00 : f32
    %39 = vector.broadcast %cst_21 : f32 to vector<64x128xf32>
    %40 = arith.select %38, %33, %39 : vector<64x128xi1>, vector<64x128xf32>
    %cst_22 = arith.constant dense<0.000000e+00> : vector<64xf32>
    %41 = vector.multi_reduction <add>, %40, %cst_22 [1] : vector<64x128xf32> to vector<64xf32>
    %42 = vector.shape_cast %41 : vector<64xf32> to vector<64x1xf32>
    %43 = arith.addf %35, %42 : vector<64x1xf32>
    %44 = arith.cmpf oge, %34, %43 : vector<64x1xf32>
    %45 = arith.extui %44 : vector<64x1xi1> to vector<64x1xi32>
    %46 = arith.sitofp %45 : vector<64x1xi32> to vector<64x1xf32>
    %47 = arith.addf %36, %46 : vector<64x1xf32>
    %48 = arith.sitofp %13 : vector<64x128xi32> to vector<64x128xf32>
    %cst_23 = arith.constant 2.000000e+00 : f32
    %49 = vector.broadcast %cst_23 : f32 to vector<64x1xf32>
    %50 = arith.addf %49, %47 : vector<64x1xf32>
    %51 = vector.broadcast %50 : vector<64x1xf32> to vector<64x128xf32>
    %52 = arith.cmpf oeq, %48, %51 : vector<64x128xf32>
    %cst_24 = arith.constant 0.000000e+00 : f32
    %53 = vector.broadcast %cst_24 : f32 to vector<64x128xf32>
    %54 = arith.select %52, %33, %53 : vector<64x128xi1>, vector<64x128xf32>
    %cst_25 = arith.constant dense<0.000000e+00> : vector<64xf32>
    %55 = vector.multi_reduction <add>, %54, %cst_25 [1] : vector<64x128xf32> to vector<64xf32>
    %56 = vector.shape_cast %55 : vector<64xf32> to vector<64x1xf32>
    %cst_26 = arith.constant 0.000000e+00 : f32
    %57 = vector.broadcast %cst_26 : f32 to vector<64x128xf32>
    %58 = arith.select %15, %12, %57 : vector<64x128xi1>, vector<64x128xf32>
    %59 = arith.addf %58, %33 : vector<64x128xf32>
    %c4_i32_27 = arith.constant 4 : i32
    %60 = vector.broadcast %c4_i32_27 : i32 to vector<64x128xi32>
    %61 = arith.cmpi eq, %13, %60 : vector<64x128xi32>
    %cst_28 = arith.constant 0.000000e+00 : f32
    %62 = vector.shape_cast %47 : vector<64x1xf32> to vector<64x1xf32>
    %63 = vector.broadcast %62 : vector<64x1xf32> to vector<64x128xf32>
    %64 = vector.broadcast %cst_28 : f32 to vector<64x128xf32>
    %65 = arith.select %61, %63, %64 : vector<64x128xi1>, vector<64x128xf32>
    %66 = arith.addf %59, %65 : vector<64x128xf32>
    %c5_i32 = arith.constant 5 : i32
    %67 = vector.broadcast %c5_i32 : i32 to vector<64x128xi32>
    %68 = arith.cmpi eq, %13, %67 : vector<64x128xi32>
    %cst_29 = arith.constant 0.000000e+00 : f32
    %69 = vector.shape_cast %56 : vector<64x1xf32> to vector<64x1xf32>
    %70 = vector.broadcast %69 : vector<64x1xf32> to vector<64x128xf32>
    %71 = vector.broadcast %cst_29 : f32 to vector<64x128xf32>
    %72 = arith.select %68, %70, %71 : vector<64x128xi1>, vector<64x128xf32>
    %73 = arith.addf %66, %72 : vector<64x128xf32>
    %c0_30 = arith.constant 0 : index
    %c0_31 = arith.constant 0 : index
    %74 = vector.load %arg7[%c0_30, %c0_31] : memref<64x128xf32, #tpu.memory_space<vmem>>, vector<64x128xf32>
    tpu.vector_store %arg7[%c0_30, %c0_31], %73 {strides = array<i32>} : memref<64x128xf32, #tpu.memory_space<vmem>>, vector<64x128xf32>,
    return
  }
  func.func @transform_0(%arg0: i32) -> (i32, i32) {
    %c0_i32 = arith.constant 0 : i32
    %c0_i32_0 = arith.constant 0 : i32
    return %arg0, %c0_i32 : i32, i32
  }
  func.func @transform_1(%arg0: i32) -> (i32, i32) {
    %c0_i32 = arith.constant 0 : i32
    %c0_i32_0 = arith.constant 0 : i32
    return %arg0, %c0_i32 : i32, i32
  }
  func.func @transform_2(%arg0: i32) -> (i32, i32) {
    %c0_i32 = arith.constant 0 : i32
    %c0_i32_0 = arith.constant 0 : i32
    %c0_i32_1 = arith.constant 0 : i32
    return %c0_i32, %c0_i32_0 : i32, i32
  }
  func.func @transform_3(%arg0: i32) -> (i32, i32) {
    %c0_i32 = arith.constant 0 : i32
    %c0_i32_0 = arith.constant 0 : i32
    %c0_i32_1 = arith.constant 0 : i32
    return %c0_i32, %c0_i32_0 : i32, i32
  }
  func.func @transform_4(%arg0: i32) -> (i32, i32) {
    %c0_i32 = arith.constant 0 : i32
    %c0_i32_0 = arith.constant 0 : i32
    %c0_i32_1 = arith.constant 0 : i32
    return %c0_i32, %c0_i32_0 : i32, i32
  }
  func.func @transform_5(%arg0: i32) -> (i32, i32) {
    %c0_i32 = arith.constant 0 : i32
    %c0_i32_0 = arith.constant 0 : i32
    %c0_i32_1 = arith.constant 0 : i32
    return %c0_i32, %c0_i32_0 : i32, i32
  }
  func.func @transform_6(%arg0: i32) -> (i32, i32) {
    %c0_i32 = arith.constant 0 : i32
    %c0_i32_0 = arith.constant 0 : i32
    return %arg0, %c0_i32 : i32, i32
  }
}

</mosaic_0001>

<llo_original>
// kernel: reinforce_forward_sample.1
$region0: #{reinforce_forward_sample.1}
  #allocation0 [shape = 'u32[]', space=smem, size = 0x4, offset = 0x4, fixed_abs, tag = 'smem constant byte address 0x4 - core index']
  #allocation1 [shape = 'u32[144,128]{1,0:T(1,128)}', space=vmem, size = 0x12000, scoped, tag = 'internal scratch']
  %s0 = inlined_call_operand.vmem [shape: f32[64,4], index: 0, kind: input, shape index: {}]
  %s1 = inlined_call_operand.vmem [shape: f32[64,1], index: 1, kind: input, shape index: {}]
  %s2 = inlined_call_operand.vmem [shape: f32[4,256], index: 2, kind: input, shape index: {}]
  %s3 = inlined_call_operand.vmem [shape: f32[1,256], index: 3, kind: input, shape index: {}]
  %s4 = inlined_call_operand.vmem [shape: f32[256,128], index: 4, kind: input, shape index: {}]
  %s5 = inlined_call_operand.vmem [shape: f32[1,128], index: 5, kind: input, shape index: {}]
  %s6 = inlined_call_operand.vmem [shape: f32[64,128], index: 6, kind: output, shape index: {}]
  %s7 = sld [smem:[#allocation0]]
  $region34: #{reinforce_forward_sample.1} parent=0
    _
  %s9 = ssub.s32 1, %s7
  %s10 = scalar_select 0, %s9, %s7
  // Predicated region
  $region2: #{reinforce_forward_sample.1} parent=0 // pred_check
    _
  $region3: #{reinforce_forward_sample.1} parent=0 // pred_check_branch
    %12 = sbr.rel (0) target = $region5
  $region4: #{reinforce_forward_sample.1} parent=0 // pred_region
    _
  $region5: #{reinforce_forward_sample.1} parent=0 // pred_fallthru
    _
  // Predicated region
  $region6: #{reinforce_forward_sample.1} parent=0 // pred_check
    _
  $region7: #{reinforce_forward_sample.1} parent=0 // pred_check_branch
    %14 = sbr.rel (0) target = $region9
  $region8: #{reinforce_forward_sample.1} parent=0 // pred_region
    _
  $region9: #{reinforce_forward_sample.1} parent=0 // pred_fallthru
    _
  // Predicated region
  $region10: #{reinforce_forward_sample.1} parent=0 // pred_check
    _
  $region11: #{reinforce_forward_sample.1} parent=0 // pred_check_branch
    %16 = sbr.rel (0) target = $region13
  $region12: #{reinforce_forward_sample.1} parent=0 // pred_region
    _
  $region13: #{reinforce_forward_sample.1} parent=0 // pred_fallthru
    _
  // Predicated region
  $region14: #{reinforce_forward_sample.1} parent=0 // pred_check
    _
  $region15: #{reinforce_forward_sample.1} parent=0 // pred_check_branch
    %18 = sbr.rel (0) target = $region17
  $region16: #{reinforce_forward_sample.1} parent=0 // pred_region
    _
  $region17: #{reinforce_forward_sample.1} parent=0 // pred_fallthru
    _
  // Predicated region
  $region18: #{reinforce_forward_sample.1} parent=0 // pred_check
    _
  $region19: #{reinforce_forward_sample.1} parent=0 // pred_check_branch
    %20 = sbr.rel (0) target = $region21
  $region20: #{reinforce_forward_sample.1} parent=0 // pred_region
    _
  $region21: #{reinforce_forward_sample.1} parent=0 // pred_fallthru
    _
  // Predicated region
  $region22: #{reinforce_forward_sample.1} parent=0 // pred_check
    _
  $region23: #{reinforce_forward_sample.1} parent=0 // pred_check_branch
    %22 = sbr.rel (0) target = $region25
  $region24: #{reinforce_forward_sample.1} parent=0 // pred_region
    _
  $region25: #{reinforce_forward_sample.1} parent=0 // pred_fallthru
    _
  %v23 = vld [vmem:[%s0] sm:$0xff]
  %v24 = vld [vmem:[%s0 + $0x8] sm:$0xff]
  %v25 = vld [vmem:[%s0 + $0x10] sm:$0xff]
  %v26 = vld [vmem:[%s0 + $0x18] sm:$0xff]
  %v27 = vld [vmem:[%s0 + $0x20] sm:$0xff]
  %v28 = vld [vmem:[%s0 + $0x28] sm:$0xff]
  %v29 = vld [vmem:[%s0 + $0x30] sm:$0xff]
  %v30 = vld [vmem:[%s0 + $0x38] sm:$0xff]
  %v31 = vld [vmem:[%s2] sm:$0xff]
  %v32 = vld [vmem:[%s3] sm:$0x3]
  %v34 = vlaneseq
  %v35 = vshrl.u32 %v34, 7
  %v36 = vsub.s32 0, %v35
  %v37 = vrot.slane %v32, %v36
  %v38 = vlaneseq
  %v39 = vshrl.u32 %v38, 7
  %v40 = vsub.s32 1, %v39
  %v41 = vrot.slane %v32, %v40
  %v45 = vcombine.high %v31, %v31
  %vm46 = vcmask 31744
  %v48 = vsel %vm46, %v23, 0
  %v51 = vsel %vm46, %v24, 0
  %v54 = vsel %vm46, %v25, 0
  %v57 = vsel %vm46, %v26, 0
  %v60 = vsel %vm46, %v27, 0
  %v63 = vsel %vm46, %v28, 0
  %v66 = vsel %vm46, %v29, 0
  %v69 = vsel %vm46, %v30, 0
  %vm71 = vcmask 1043456
  %v72 = vsel %vm71, %v31, 0
  %v74 = vsel %vm71, %v45, 0
  %76 = vmatprep.subr.mxu0 %v74
  %77 = vmatpush1.msra.mxu0 %v72
  %78 = vmatprep.subr.mxu0 0.0
  %79 = vmatpush1.msra.mxu0 0.0
  %80 = vmatprep.subr.mxu0 0.0
  %81 = vmatpush1.msra.mxu0 0.0
  %82 = vmatprep.subr.mxu0 0.0
  %83 = vmatpush1.msra.mxu0 0.0
  %84 = vmatprep.subr.mxu0 0.0
  %85 = vmatpush1.msra.mxu0 0.0
  %86 = vmatprep.subr.mxu0 0.0
  %87 = vmatpush1.msra.mxu0 0.0
  %88 = vmatprep.subr.mxu0 0.0
  %89 = vmatpush1.msra.mxu0 0.0
  %90 = vmatprep.subr.mxu0 0.0
  %91 = vmatpush1.msra.mxu0 0.0
  %92 = vmatprep.subr.mxu0 0.0
  %93 = vmatpush1.msra.mxu0 0.0
  %94 = vmatprep.subr.mxu0 0.0
  %95 = vmatpush1.msra.mxu0 0.0
  %96 = vmatprep.subr.mxu0 0.0
  %97 = vmatpush1.msra.mxu0 0.0
  %98 = vmatprep.subr.mxu0 0.0
  %99 = vmatpush1.msra.mxu0 0.0
  %100 = vmatprep.subr.mxu0 0.0
  %101 = vmatpush1.msra.mxu0 0.0
  %102 = vmatprep.subr.mxu0 0.0
  %103 = vmatpush1.msra.mxu0 0.0
  %104 = vmatprep.subr.mxu0 0.0
  %105 = vmatpush1.msra.mxu0 0.0
  %106 = vmatprep.subr.mxu0 0.0
  %107 = vmatpush1.msra.mxu0 0.0
  %108 = vmatprep.subr.mxu0 0.0
  %109 = vmatpush1.msra.mxu0 0.0
  %110 = vmatprep.subr.mxu0 0.0
  %111 = vmatpush1.msra.mxu0 0.0
  %112 = vmatprep.subr.mxu0 0.0
  %113 = vmatpush1.msra.mxu0 0.0
  %114 = vmatprep.subr.mxu0 0.0
  %115 = vmatpush1.msra.mxu0 0.0
  %116 = vmatprep.subr.mxu0 0.0
  %117 = vmatpush1.msra.mxu0 0.0
  %118 = vmatprep.subr.mxu0 0.0
  %119 = vmatpush1.msra.mxu0 0.0
  %120 = vmatprep.subr.mxu0 0.0
  %121 = vmatpush1.msra.mxu0 0.0
  %122 = vmatprep.subr.mxu0 0.0
  %123 = vmatpush1.msra.mxu0 0.0
  %124 = vmatprep.subr.mxu0 0.0
  %125 = vmatpush1.msra.mxu0 0.0
  %126 = vmatprep.subr.mxu0 0.0
  %127 = vmatpush1.msra.mxu0 0.0
  %128 = vmatprep.subr.mxu0 0.0
  %129 = vmatpush1.msra.mxu0 0.0
  %130 = vmatprep.subr.mxu0 0.0
  %131 = vmatpush1.msra.mxu0 0.0
  %132 = vmatprep.subr.mxu0 0.0
  %133 = vmatpush1.msra.mxu0 0.0
  %134 = vmatprep.subr.mxu0 0.0
  %135 = vmatpush1.msra.mxu0 0.0
  %136 = vmatprep.subr.mxu0 0.0
  %137 = vmatpush1.msra.mxu0 0.0
  %138 = vmatprep.subr.mxu0 0.0
  %139 = vmatpush1.msra.mxu0 0.0
  %140 = vmatprep.mubr.f32.mxu0 0.0
  %141 = vmatmul.mubr.f32.gmra.mrb[0].mxu0 %v48
  %v142 = vpop.f32.mrb[0].mxu0
  %v143 = vadd.f32 %v37, %v142
  %v144 = vpop.f32.mrb[0].mxu0
  %v145 = vadd.f32 %v41, %v144
  %146 = vmatprep.mubr.f32.mxu0 0.0
  %147 = vmatmul.mubr.f32.gmra.mrb[0].mxu0 %v51
  %v148 = vpop.f32.mrb[0].mxu0
  %v149 = vadd.f32 %v37, %v148
  %v150 = vpop.f32.mrb[0].mxu0
  %v151 = vadd.f32 %v41, %v150
  %152 = vmatprep.mubr.f32.mxu0 0.0
  %153 = vmatmul.mubr.f32.gmra.mrb[0].mxu0 %v54
  %v154 = vpop.f32.mrb[0].mxu0
  %v155 = vadd.f32 %v37, %v154
  %v156 = vpop.f32.mrb[0].mxu0
  %v157 = vadd.f32 %v41, %v156
  %158 = vmatprep.mubr.f32.mxu0 0.0
  %159 = vmatmul.mubr.f32.gmra.mrb[0].mxu0 %v57
  %v160 = vpop.f32.mrb[0].mxu0
  %v161 = vadd.f32 %v37, %v160
  %v162 = vpop.f32.mrb[0].mxu0
  %v163 = vadd.f32 %v41, %v162
  %164 = vmatprep.mubr.f32.mxu0 0.0
  %165 = vmatmul.mubr.f32.gmra.mrb[0].mxu0 %v60
  %v166 = vpop.f32.mrb[0].mxu0
  %v167 = vadd.f32 %v37, %v166
  %v168 = vpop.f32.mrb[0].mxu0
  %v169 = vadd.f32 %v41, %v168
  %170 = vmatprep.mubr.f32.mxu0 0.0
  %171 = vmatmul.mubr.f32.gmra.mrb[0].mxu0 %v63
  %v172 = vpop.f32.mrb[0].mxu0
  %v173 = vadd.f32 %v37, %v172
  %v174 = vpop.f32.mrb[0].mxu0
  %v175 = vadd.f32 %v41, %v174
  %176 = vmatprep.mubr.f32.mxu0 0.0
  %177 = vmatmul.mubr.f32.gmra.mrb[0].mxu0 %v66
  %v178 = vpop.f32.mrb[0].mxu0
  %v179 = vadd.f32 %v37, %v178
  %v180 = vpop.f32.mrb[0].mxu0
  %v181 = vadd.f32 %v41, %v180
  %182 = vmatprep.mubr.f32.mxu0 0.0
  %183 = vmatmul.mubr.f32.gmra.mrb[0].mxu0 %v69
  %v184 = vpop.f32.mrb[0].mxu0
  %v185 = vadd.f32 %v37, %v184
  %v186 = vpop.f32.mrb[0].mxu0
  %v187 = vadd.f32 %v41, %v186
  %188 = vdwg.mxu0
  %v189 = vmax.f32 %v143, 0.0
  %v190 = vmax.f32 %v145, 0.0
  %v191 = vmax.f32 %v149, 0.0
  %v192 = vmax.f32 %v151, 0.0
  %v193 = vmax.f32 %v155, 0.0
  %v194 = vmax.f32 %v157, 0.0
  %v195 = vmax.f32 %v161, 0.0
  %v196 = vmax.f32 %v163, 0.0
  %v197 = vmax.f32 %v167, 0.0
  %v198 = vmax.f32 %v169, 0.0
  %v199 = vmax.f32 %v173, 0.0
  %v200 = vmax.f32 %v175, 0.0
  %v201 = vmax.f32 %v179, 0.0
  %v202 = vmax.f32 %v181, 0.0
  %v203 = vmax.f32 %v185, 0.0
  %v204 = vmax.f32 %v187, 0.0
  %v205 = vld [vmem:[%s4] sm:$0xff]
  %v206 = vld [vmem:[%s4 + $0x8] sm:$0xff]
  %v207 = vld [vmem:[%s4 + $0x10] sm:$0xff]
  %v208 = vld [vmem:[%s4 + $0x18] sm:$0xff]
  %v209 = vld [vmem:[%s4 + $0x20] sm:$0xff]
  %v210 = vld [vmem:[%s4 + $0x28] sm:$0xff]
  %v211 = vld [vmem:[%s4 + $0x30] sm:$0xff]
  %v212 = vld [vmem:[%s4 + $0x38] sm:$0xff]
  %v213 = vld [vmem:[%s4 + $0x40] sm:$0xff]
  %v214 = vld [vmem:[%s4 + $0x48] sm:$0xff]
  %v215 = vld [vmem:[%s4 + $0x50] sm:$0xff]
  %v216 = vld [vmem:[%s4 + $0x58] sm:$0xff]
  %v217 = vld [vmem:[%s4 + $0x60] sm:$0xff]
  %v218 = vld [vmem:[%s4 + $0x68] sm:$0xff]
  %v219 = vld [vmem:[%s4 + $0x70] sm:$0xff]
  %v220 = vld [vmem:[%s4 + $0x78] sm:$0xff]
  %v221 = vld [vmem:[%s4 + $0x80] sm:$0xff]
  %v222 = vld [vmem:[%s4 + $0x88] sm:$0xff]
  %v223 = vld [vmem:[%s4 + $0x90] sm:$0xff]
  %v224 = vld [vmem:[%s4 + $0x98] sm:$0xff]
  %v225 = vld [vmem:[%s4 + $0xa0] sm:$0xff]
  %v226 = vld [vmem:[%s4 + $0xa8] sm:$0xff]
  %v227 = vld [vmem:[%s4 + $0xb0] sm:$0xff]
  %v228 = vld [vmem:[%s4 + $0xb8] sm:$0xff]
  %v229 = vld [vmem:[%s4 + $0xc0] sm:$0xff]
  %v230 = vld [vmem:[%s4 + $0xc8] sm:$0xff]
  %v231 = vld [vmem:[%s4 + $0xd0] sm:$0xff]
  %v232 = vld [vmem:[%s4 + $0xd8] sm:$0xff]
  %v233 = vld [vmem:[%s4 + $0xe0] sm:$0xff]
  %v234 = vld [vmem:[%s4 + $0xe8] sm:$0xff]
  %v235 = vld [vmem:[%s4 + $0xf0] sm:$0xff]
  %v236 = vld [vmem:[%s4 + $0xf8] sm:$0xff]
  %v237 = vld [vmem:[%s5] sm:$0x1]
  %v239 = vlaneseq
  %v240 = vshrl.u32 %v239, 7
  %v241 = vsub.s32 0, %v240
  %v242 = vrot.slane %v237, %v241
  %244 = vmatprep.subr.mxu0 0.0
  %245 = vmatpush1.msra.mxu0 %v205
  %246 = vmatprep.subr.mxu0 0.0
  %247 = vmatpush1.msra.mxu0 %v206
  %248 = vmatprep.subr.mxu0 0.0
  %249 = vmatpush1.msra.mxu0 %v207
  %250 = vmatprep.subr.mxu0 0.0
  %251 = vmatpush1.msra.mxu0 %v208
  %252 = vmatprep.subr.mxu0 0.0
  %253 = vmatpush1.msra.mxu0 %v209
  %254 = vmatprep.subr.mxu0 0.0
  %255 = vmatpush1.msra.mxu0 %v210
  %256 = vmatprep.subr.mxu0 0.0
  %257 = vmatpush1.msra.mxu0 %v211
  %258 = vmatprep.subr.mxu0 0.0
  %259 = vmatpush1.msra.mxu0 %v212
  %260 = vmatprep.subr.mxu0 0.0
  %261 = vmatpush1.msra.mxu0 %v213
  %262 = vmatprep.subr.mxu0 0.0
  %263 = vmatpush1.msra.mxu0 %v214
  %264 = vmatprep.subr.mxu0 0.0
  %265 = vmatpush1.msra.mxu0 %v215
  %266 = vmatprep.subr.mxu0 0.0
  %267 = vmatpush1.msra.mxu0 %v216
  %268 = vmatprep.subr.mxu0 0.0
  %269 = vmatpush1.msra.mxu0 %v217
  %270 = vmatprep.subr.mxu0 0.0
  %271 = vmatpush1.msra.mxu0 %v218
  %272 = vmatprep.subr.mxu0 0.0
  %273 = vmatpush1.msra.mxu0 %v219
  %274 = vmatprep.subr.mxu0 0.0
  %275 = vmatpush1.msra.mxu0 %v220
  %276 = vmatprep.subr.mxu0 0.0
  %277 = vmatpush1.msra.mxu0 %v221
  %278 = vmatprep.subr.mxu0 0.0
  %279 = vmatpush1.msra.mxu0 %v222
  %280 = vmatprep.subr.mxu0 0.0
  %281 = vmatpush1.msra.mxu0 %v223
  %282 = vmatprep.subr.mxu0 0.0
  %283 = vmatpush1.msra.mxu0 %v224
  %284 = vmatprep.subr.mxu0 0.0
  %285 = vmatpush1.msra.mxu0 %v225
  %286 = vmatprep.subr.mxu0 0.0
  %287 = vmatpush1.msra.mxu0 %v226
  %288 = vmatprep.subr.mxu0 0.0
  %289 = vmatpush1.msra.mxu0 %v227
  %290 = vmatprep.subr.mxu0 0.0
  %291 = vmatpush1.msra.mxu0 %v228
  %292 = vmatprep.subr.mxu0 0.0
  %293 = vmatpush1.msra.mxu0 %v229
  %294 = vmatprep.subr.mxu0 0.0
  %295 = vmatpush1.msra.mxu0 %v230
  %296 = vmatprep.subr.mxu0 0.0
  %297 = vmatpush1.msra.mxu0 %v231
  %298 = vmatprep.subr.mxu0 0.0
  %299 = vmatpush1.msra.mxu0 %v232
  %300 = vmatprep.subr.mxu0 0.0
  %301 = vmatpush1.msra.mxu0 %v233
  %302 = vmatprep.subr.mxu0 0.0
  %303 = vmatpush1.msra.mxu0 %v234
  %304 = vmatprep.subr.mxu0 0.0
  %305 = vmatpush1.msra.mxu0 %v235
  %306 = vmatprep.subr.mxu0 0.0
  %307 = vmatpush1.msra.mxu0 %v236
  %308 = vmatprep.mubr.f32.mxu0 %v190
  %309 = vmatmul.mubr.f32.gmra.mrb[0].mxu0 %v189
  %v310 = vpop.f32.mrb[0].mxu0
  %v311 = vadd.f32 %v242, %v310
  %v312 = vpop.f32.mrb[0].mxu0
  %313 = vmatprep.mubr.f32.mxu0 %v192
  %314 = vmatmul.mubr.f32.gmra.mrb[0].mxu0 %v191
  %v315 = vpop.f32.mrb[0].mxu0
  %v316 = vadd.f32 %v242, %v315
  %v317 = vpop.f32.mrb[0].mxu0
  %318 = vmatprep.mubr.f32.mxu0 %v194
  %319 = vmatmul.mubr.f32.gmra.mrb[0].mxu0 %v193
  %v320 = vpop.f32.mrb[0].mxu0
  %v321 = vadd.f32 %v242, %v320
  %v322 = vpop.f32.mrb[0].mxu0
  %323 = vmatprep.mubr.f32.mxu0 %v196
  %324 = vmatmul.mubr.f32.gmra.mrb[0].mxu0 %v195
  %v325 = vpop.f32.mrb[0].mxu0
  %v326 = vadd.f32 %v242, %v325
  %v327 = vpop.f32.mrb[0].mxu0
  %328 = vmatprep.mubr.f32.mxu0 %v198
  %329 = vmatmul.mubr.f32.gmra.mrb[0].mxu0 %v197
  %v330 = vpop.f32.mrb[0].mxu0
  %v331 = vadd.f32 %v242, %v330
  %v332 = vpop.f32.mrb[0].mxu0
  %333 = vmatprep.mubr.f32.mxu0 %v200
  %334 = vmatmul.mubr.f32.gmra.mrb[0].mxu0 %v199
  %v335 = vpop.f32.mrb[0].mxu0
  %v336 = vadd.f32 %v242, %v335
  %v337 = vpop.f32.mrb[0].mxu0
  %338 = vmatprep.mubr.f32.mxu0 %v202
  %339 = vmatmul.mubr.f32.gmra.mrb[0].mxu0 %v201
  %v340 = vpop.f32.mrb[0].mxu0
  %v341 = vadd.f32 %v242, %v340
  %v342 = vpop.f32.mrb[0].mxu0
  %343 = vmatprep.mubr.f32.mxu0 %v204
  %344 = vmatmul.mubr.f32.gmra.mrb[0].mxu0 %v203
  %v345 = vpop.f32.mrb[0].mxu0
  %v346 = vadd.f32 %v242, %v345
  %v347 = vpop.f32.mrb[0].mxu0
  %348 = vdwg.mxu0
  %v349 = vlaneseq
  %v350 = vand.u32 %v349, 127
  %vm351 = vcmp.lt.s32.totalorder %v350, 2
  %vm352 = vcmp.ge.s32.totalorder %v350, 2
  %vm353 = vcmp.lt.s32.totalorder %v350, 4
  %vm354 = vmand %vm352, %vm353
  %v355 = vsel %vm354, %v311, -1e+30
  %v356 = vsel %vm354, %v316, -1e+30
  %v357 = vsel %vm354, %v321, -1e+30
  %v358 = vsel %vm354, %v326, -1e+30
  %v359 = vsel %vm354, %v331, -1e+30
  %v360 = vsel %vm354, %v336, -1e+30
  %v361 = vsel %vm354, %v341, -1e+30
  %v362 = vsel %vm354, %v346, -1e+30
  %363 = vmax.xlane.f32.xlu0 %v355
  %v364 = vpop.xlane.xlu0 %363
  %365 = vmax.xlane.f32.xlu0 %v356
  %v366 = vpop.xlane.xlu0 %365
  %367 = vmax.xlane.f32.xlu0 %v357
  %v368 = vpop.xlane.xlu0 %367
  %369 = vmax.xlane.f32.xlu0 %v358
  %v370 = vpop.xlane.xlu0 %369
  %371 = vmax.xlane.f32.xlu0 %v359
  %v372 = vpop.xlane.xlu0 %371
  %373 = vmax.xlane.f32.xlu0 %v360
  %v374 = vpop.xlane.xlu0 %373
  %375 = vmax.xlane.f32.xlu0 %v361
  %v376 = vpop.xlane.xlu0 %375
  %377 = vmax.xlane.f32.xlu0 %v362
  %v378 = vpop.xlane.xlu0 %377
  %v379 = vsub.f32 %v355, %v364
  %v380 = vsub.f32 %v356, %v366
  %v381 = vsub.f32 %v357, %v368
  %v382 = vsub.f32 %v358, %v370
  %v383 = vsub.f32 %v359, %v372
  %v384 = vsub.f32 %v360, %v374
  %v385 = vsub.f32 %v361, %v376
  %v386 = vsub.f32 %v362, %v378
  %v387 = vmul.f32 %v379, 1.442695
  %v388 = vpow.pop %v387
  %v389 = vmul.f32 %v380, 1.442695
  %v390 = vpow.pop %v389
  %v391 = vmul.f32 %v381, 1.442695
  %v392 = vpow.pop %v391
  %v393 = vmul.f32 %v382, 1.442695
  %v394 = vpow.pop %v393
  %v395 = vmul.f32 %v383, 1.442695
  %v396 = vpow.pop %v395
  %v397 = vmul.f32 %v384, 1.442695
  %v398 = vpow.pop %v397
  %v399 = vmul.f32 %v385, 1.442695
  %v400 = vpow.pop %v399
  %v401 = vmul.f32 %v386, 1.442695
  %v402 = vpow.pop %v401
  %v403 = vsel %vm354, %v388, 0.0
  %v404 = vsel %vm354, %v390, 0.0
  %v405 = vsel %vm354, %v392, 0.0
  %v406 = vsel %vm354, %v394, 0.0
  %v407 = vsel %vm354, %v396, 0.0
  %v408 = vsel %vm354, %v398, 0.0
  %v409 = vsel %vm354, %v400, 0.0
  %v410 = vsel %vm354, %v402, 0.0
  %411 = vadd.xlane.f32.xlu0 %v403
  %v412 = vpop.xlane.xlu0 %411
  %413 = vadd.xlane.f32.xlu0 %v404
  %v414 = vpop.xlane.xlu0 %413
  %415 = vadd.xlane.f32.xlu0 %v405
  %v416 = vpop.xlane.xlu0 %415
  %417 = vadd.xlane.f32.xlu0 %v406
  %v418 = vpop.xlane.xlu0 %417
  %419 = vadd.xlane.f32.xlu0 %v407
  %v420 = vpop.xlane.xlu0 %419
  %421 = vadd.xlane.f32.xlu0 %v408
  %v422 = vpop.xlane.xlu0 %421
  %423 = vadd.xlane.f32.xlu0 %v409
  %v424 = vpop.xlane.xlu0 %423
  %425 = vadd.xlane.f32.xlu0 %v410
  %v426 = vpop.xlane.xlu0 %425
  %v427 = vrcp.pop %v412
  %v428 = vmul.f32 %v403, %v427
  %v429 = vrcp.pop %v414
  %v430 = vmul.f32 %v404, %v429
  %v431 = vrcp.pop %v416
  %v432 = vmul.f32 %v405, %v431
  %v433 = vrcp.pop %v418
  %v434 = vmul.f32 %v406, %v433
  %v435 = vrcp.pop %v420
  %v436 = vmul.f32 %v407, %v435
  %v437 = vrcp.pop %v422
  %v438 = vmul.f32 %v408, %v437
  %v439 = vrcp.pop %v424
  %v440 = vmul.f32 %v409, %v439
  %v441 = vrcp.pop %v426
  %v442 = vmul.f32 %v410, %v441
  %v443 = vld [vmem:[%s1] sm:$0xff]
  %v444 = vld [vmem:[%s1 + $0x8] sm:$0xff]
  %v445 = vld [vmem:[%s1 + $0x10] sm:$0xff]
  %v446 = vld [vmem:[%s1 + $0x18] sm:$0xff]
  %v447 = vld [vmem:[%s1 + $0x20] sm:$0xff]
  %v448 = vld [vmem:[%s1 + $0x28] sm:$0xff]
  %v449 = vld [vmem:[%s1 + $0x30] sm:$0xff]
  %v450 = vld [vmem:[%s1 + $0x38] sm:$0xff]
  %vm451 = vcmp.eq.s32.totalorder %v350, 2
  %v452 = vsel %vm451, %v428, 0.0
  %v453 = vsel %vm451, %v430, 0.0
  %v454 = vsel %vm451, %v432, 0.0
  %v455 = vsel %vm451, %v434, 0.0
  %v456 = vsel %vm451, %v436, 0.0
  %v457 = vsel %vm451, %v438, 0.0
  %v458 = vsel %vm451, %v440, 0.0
  %v459 = vsel %vm451, %v442, 0.0
  %460 = vadd.xlane.f32.xlu0 %v452
  %v461 = vpop.xlane.xlu0 %460
  %462 = vadd.xlane.f32.xlu0 %v453
  %v463 = vpop.xlane.xlu0 %462
  %464 = vadd.xlane.f32.xlu0 %v454
  %v465 = vpop.xlane.xlu0 %464
  %466 = vadd.xlane.f32.xlu0 %v455
  %v467 = vpop.xlane.xlu0 %466
  %468 = vadd.xlane.f32.xlu0 %v456
  %v469 = vpop.xlane.xlu0 %468
  %470 = vadd.xlane.f32.xlu0 %v457
  %v471 = vpop.xlane.xlu0 %470
  %472 = vadd.xlane.f32.xlu0 %v458
  %v473 = vpop.xlane.xlu0 %472
  %474 = vadd.xlane.f32.xlu0 %v459
  %v475 = vpop.xlane.xlu0 %474
  %v476 = vadd.f32 %v461, 0.0
  %v477 = vadd.f32 %v463, 0.0
  %v478 = vadd.f32 %v465, 0.0
  %v479 = vadd.f32 %v467, 0.0
  %v480 = vadd.f32 %v469, 0.0
  %v481 = vadd.f32 %v471, 0.0
  %v482 = vadd.f32 %v473, 0.0
  %v483 = vadd.f32 %v475, 0.0
  %vm484 = vcmp.ge.f32.partialorder %v443, %v476
  %vm485 = vcmp.ge.f32.partialorder %v444, %v477
  %vm486 = vcmp.ge.f32.partialorder %v445, %v478
  %vm487 = vcmp.ge.f32.partialorder %v446, %v479
  %vm488 = vcmp.ge.f32.partialorder %v447, %v480
  %vm489 = vcmp.ge.f32.partialorder %v448, %v481
  %vm490 = vcmp.ge.f32.partialorder %v449, %v482
  %vm491 = vcmp.ge.f32.partialorder %v450, %v483
  %v492 = vsel %vm484, 1, 0
  %v493 = vsel %vm485, 1, 0
  %v494 = vsel %vm486, 1, 0
  %v495 = vsel %vm487, 1, 0
  %v496 = vsel %vm488, 1, 0
  %v497 = vsel %vm489, 1, 0
  %v498 = vsel %vm490, 1, 0
  %v499 = vsel %vm491, 1, 0
  %v500 = vcvt.s32.f32 %v492
  %v501 = vcvt.s32.f32 %v493
  %v502 = vcvt.s32.f32 %v494
  %v503 = vcvt.s32.f32 %v495
  %v504 = vcvt.s32.f32 %v496
  %v505 = vcvt.s32.f32 %v497
  %v506 = vcvt.s32.f32 %v498
  %v507 = vcvt.s32.f32 %v499
  %v508 = vadd.f32 %v500, 0.0
  %v509 = vadd.f32 %v501, 0.0
  %v510 = vadd.f32 %v502, 0.0
  %v511 = vadd.f32 %v503, 0.0
  %v512 = vadd.f32 %v504, 0.0
  %v513 = vadd.f32 %v505, 0.0
  %v514 = vadd.f32 %v506, 0.0
  %v515 = vadd.f32 %v507, 0.0
  %v516 = vcvt.s32.f32 %v350
  %v517 = vadd.f32 %v508, 2.0
  %v518 = vadd.f32 %v509, 2.0
  %v519 = vadd.f32 %v510, 2.0
  %v520 = vadd.f32 %v511, 2.0
  %v521 = vadd.f32 %v512, 2.0
  %v522 = vadd.f32 %v513, 2.0
  %v523 = vadd.f32 %v514, 2.0
  %v524 = vadd.f32 %v515, 2.0
  %526 = vset.pattern.permute.xlu0 0
  %527 = vperm.xlu0 %526, %v517
  %v528 = vpop.permute.xlu0 %527
  %531 = vset.pattern.permute.xlu0 0
  %532 = vperm.xlu0 %531, %v518
  %v533 = vpop.permute.xlu0 %532
  %536 = vset.pattern.permute.xlu0 0
  %537 = vperm.xlu0 %536, %v519
  %v538 = vpop.permute.xlu0 %537
  %541 = vset.pattern.permute.xlu0 0
  %542 = vperm.xlu0 %541, %v520
  %v543 = vpop.permute.xlu0 %542
  %546 = vset.pattern.permute.xlu0 0
  %547 = vperm.xlu0 %546, %v521
  %v548 = vpop.permute.xlu0 %547
  %551 = vset.pattern.permute.xlu0 0
  %552 = vperm.xlu0 %551, %v522
  %v553 = vpop.permute.xlu0 %552
  %556 = vset.pattern.permute.xlu0 0
  %557 = vperm.xlu0 %556, %v523
  %v558 = vpop.permute.xlu0 %557
  %561 = vset.pattern.permute.xlu0 0
  %562 = vperm.xlu0 %561, %v524
  %v563 = vpop.permute.xlu0 %562
  %vm565 = vcmp.eq.f32.partialorder %v516, %v528
  %vm566 = vcmp.eq.f32.partialorder %v516, %v533
  %vm567 = vcmp.eq.f32.partialorder %v516, %v538
  %vm568 = vcmp.eq.f32.partialorder %v516, %v543
  %vm569 = vcmp.eq.f32.partialorder %v516, %v548
  %vm570 = vcmp.eq.f32.partialorder %v516, %v553
  %vm571 = vcmp.eq.f32.partialorder %v516, %v558
  %vm572 = vcmp.eq.f32.partialorder %v516, %v563
  %v573 = vsel %vm565, %v428, 0.0
  %v574 = vsel %vm566, %v430, 0.0
  %v575 = vsel %vm567, %v432, 0.0
  %v576 = vsel %vm568, %v434, 0.0
  %v577 = vsel %vm569, %v436, 0.0
  %v578 = vsel %vm570, %v438, 0.0
  %v579 = vsel %vm571, %v440, 0.0
  %v580 = vsel %vm572, %v442, 0.0
  %581 = vadd.xlane.f32.xlu0 %v573
  %v582 = vpop.xlane.xlu0 %581
  %583 = vadd.xlane.f32.xlu0 %v574
  %v584 = vpop.xlane.xlu0 %583
  %585 = vadd.xlane.f32.xlu0 %v575
  %v586 = vpop.xlane.xlu0 %585
  %587 = vadd.xlane.f32.xlu0 %v576
  %v588 = vpop.xlane.xlu0 %587
  %589 = vadd.xlane.f32.xlu0 %v577
  %v590 = vpop.xlane.xlu0 %589
  %591 = vadd.xlane.f32.xlu0 %v578
  %v592 = vpop.xlane.xlu0 %591
  %593 = vadd.xlane.f32.xlu0 %v579
  %v594 = vpop.xlane.xlu0 %593
  %595 = vadd.xlane.f32.xlu0 %v580
  %v596 = vpop.xlane.xlu0 %595
  %v597 = vsel %vm351, %v311, 0.0
  %v598 = vsel %vm351, %v316, 0.0
  %v599 = vsel %vm351, %v321, 0.0
  %v600 = vsel %vm351, %v326, 0.0
  %v601 = vsel %vm351, %v331, 0.0
  %v602 = vsel %vm351, %v336, 0.0
  %v603 = vsel %vm351, %v341, 0.0
  %v604 = vsel %vm351, %v346, 0.0
  %v605 = vadd.f32 %v597, %v428
  %v606 = vadd.f32 %v598, %v430
  %v607 = vadd.f32 %v599, %v432
  %v608 = vadd.f32 %v600, %v434
  %v609 = vadd.f32 %v601, %v436
  %v610 = vadd.f32 %v602, %v438
  %v611 = vadd.f32 %v603, %v440
  %v612 = vadd.f32 %v604, %v442
  %vm613 = vcmp.eq.s32.totalorder %v350, 4
  %615 = vset.pattern.permute.xlu0 0
  %616 = vperm.xlu0 %615, %v508
  %v617 = vpop.permute.xlu0 %616
  %620 = vset.pattern.permute.xlu0 0
  %621 = vperm.xlu0 %620, %v509
  %v622 = vpop.permute.xlu0 %621
  %625 = vset.pattern.permute.xlu0 0
  %626 = vperm.xlu0 %625, %v510
  %v627 = vpop.permute.xlu0 %626
  %630 = vset.pattern.permute.xlu0 0
  %631 = vperm.xlu0 %630, %v511
  %v632 = vpop.permute.xlu0 %631
  %635 = vset.pattern.permute.xlu0 0
  %636 = vperm.xlu0 %635, %v512
  %v637 = vpop.permute.xlu0 %636
  %640 = vset.pattern.permute.xlu0 0
  %641 = vperm.xlu0 %640, %v513
  %v642 = vpop.permute.xlu0 %641
  %645 = vset.pattern.permute.xlu0 0
  %646 = vperm.xlu0 %645, %v514
  %v647 = vpop.permute.xlu0 %646
  %650 = vset.pattern.permute.xlu0 0
  %651 = vperm.xlu0 %650, %v515
  %v652 = vpop.permute.xlu0 %651
  %v654 = vsel %vm613, %v617, 0.0
  %v655 = vsel %vm613, %v622, 0.0
  %v656 = vsel %vm613, %v627, 0.0
  %v657 = vsel %vm613, %v632, 0.0
  %v658 = vsel %vm613, %v637, 0.0
  %v659 = vsel %vm613, %v642, 0.0
  %v660 = vsel %vm613, %v647, 0.0
  %v661 = vsel %vm613, %v652, 0.0
  %v662 = vadd.f32 %v605, %v654
  %v663 = vadd.f32 %v606, %v655
  %v664 = vadd.f32 %v607, %v656
  %v665 = vadd.f32 %v608, %v657
  %v666 = vadd.f32 %v609, %v658
  %v667 = vadd.f32 %v610, %v659
  %v668 = vadd.f32 %v611, %v660
  %v669 = vadd.f32 %v612, %v661
  %vm670 = vcmp.eq.s32.totalorder %v350, 5
  %v671 = vsel %vm670, %v582, 0.0
  %v672 = vsel %vm670, %v584, 0.0
  %v673 = vsel %vm670, %v586, 0.0
  %v674 = vsel %vm670, %v588, 0.0
  %v675 = vsel %vm670, %v590, 0.0
  %v676 = vsel %vm670, %v592, 0.0
  %v677 = vsel %vm670, %v594, 0.0
  %v678 = vsel %vm670, %v596, 0.0
  %v679 = vadd.f32 %v662, %v671
  %v680 = vadd.f32 %v663, %v672
  %v681 = vadd.f32 %v664, %v673
  %v682 = vadd.f32 %v665, %v674
  %v683 = vadd.f32 %v666, %v675
  %v684 = vadd.f32 %v667, %v676
  %v685 = vadd.f32 %v668, %v677
  %v686 = vadd.f32 %v669, %v678
  %687 = vst [vmem:[%s6] sm:$0xff] %v679
  %688 = vst [vmem:[%s6 + $0x8] sm:$0xff] %v680
  %689 = vst [vmem:[%s6 + $0x10] sm:$0xff] %v681
  %690 = vst [vmem:[%s6 + $0x18] sm:$0xff] %v682
  %691 = vst [vmem:[%s6 + $0x20] sm:$0xff] %v683
  %692 = vst [vmem:[%s6 + $0x28] sm:$0xff] %v684
  %693 = vst [vmem:[%s6 + $0x30] sm:$0xff] %v685
  %694 = vst [vmem:[%s6 + $0x38] sm:$0xff] %v686
  // Predicated region
  $region26: #{reinforce_forward_sample.1} parent=0 // pred_check
    _
  $region27: #{reinforce_forward_sample.1} parent=0 // pred_check_branch
    %696 = sbr.rel (0) target = $region29
  $region28: #{reinforce_forward_sample.1} parent=0 // pred_region
    _
  $region29: #{reinforce_forward_sample.1} parent=0 // pred_fallthru
    _
  // Predicated region
  $region30: #{reinforce_forward_sample.1} parent=0 // pred_check
    _
  $region31: #{reinforce_forward_sample.1} parent=0 // pred_check_branch
    %698 = sbr.rel (0) target = $region33
  $region32: #{reinforce_forward_sample.1} parent=0 // pred_region
    _
  $region33: #{reinforce_forward_sample.1} parent=0 // pred_fallthru
    _

</llo_original>
